<compile_context>
chip_gen: v7x
topology: tpu7x:2x2x1
jax: 0.10.0
libtpu: 0.0.40
codegen_flags: <defaults>
</compile_context>

<pallas_src>
import functools

import jax
import jax.numpy as jnp
from jax.experimental import pallas as pl
from jax.experimental.pallas import tpu as pltpu

_LANES = 128


def _undersp_kernel(x_ref, o_ref, *, beta, inv_beta, threshold, value):
    x = x_ref[...]
    xf = x.astype(jnp.float32)
    if beta == 1.0:
        bx = xf
        sp_small = jnp.log1p(jnp.exp(bx))              # no scale needed
    else:
        bx = beta * xf
        sp_small = jnp.log1p(jnp.exp(bx)) * inv_beta   # multiply, not divide
    # softplus with threshold: linear passthrough where beta*x > threshold.
    # NOTE: exp(bx) may overflow to inf in the unselected branch; the select
    # discards it, matching PyTorch.  Do not "simplify" the where away into
    # arithmetic masking (would produce inf/NaN).
    sp = jnp.where(bx > threshold, xf, sp_small)
    o_ref[...] = (sp - value).astype(o_ref.dtype)
    # TODO(synk): on v6e/v7x (bf16 EUP) consider bf16 exp/log1p for bf16 inputs
    # to double EUP throughput; kept f32 internally for accuracy parity.


def _block_bytes_for_device():
    """Generation-aware block size.

    v6e: 32 MiB scoped-VMEM default / 128 MiB physical  -> 4 MiB blocks
         (double-buffered in+out = 16 MiB, well under the default).
    v5e: 16 MiB scoped default                           -> 2 MiB blocks.
    v7x: 64 MiB physical, keep headroom for deeper buffering -> 2 MiB blocks.
    """
    try:
        kind = jax.devices()[0].device_kind.lower()
    except Exception:
        kind = ""
    if "v6" in kind:
        return 4 * 1024 * 1024
    return 2 * 1024 * 1024


def _run_slab(kernel, slab, block_rows_target, dtype, itemsize):
    rows = slab.shape[0]
    if rows <= block_rows_target:
        block_rows = rows            # full-array block: always a legal block shape
        grid = (1,)
    else:
        block_rows = block_rows_target
        grid = (pl.cdiv(rows, block_rows),)   # partial final block masked by Pallas

    n_slab = rows * _LANES
    cost = pl.CostEstimate(
        flops=5 * n_slab,
        transcendentals=2 * n_slab,
        bytes_accessed=2 * itemsize * n_slab,
    )
    return pl.pallas_call(
        kernel,
        out_shape=jax.ShapeDtypeStruct((rows, _LANES), dtype),
        grid_spec=pltpu.PrefetchScalarGridSpec(
            num_scalar_prefetch=0,
            grid=grid,
            in_specs=[pl.BlockSpec((block_rows, _LANES), lambda i: (i, 0))],
            out_specs=pl.BlockSpec((block_rows, _LANES), lambda i: (i, 0)),
        ),
        compiler_params=pltpu.CompilerParams(
            # "parallel" lets multi-TC parts (v7x) shard the grid axis.
            # TODO(synk): evaluate pltpu.CORE_PARALLEL and pl.Buffered(3) on v7x.
            dimension_semantics=("parallel",),
        ),
        cost_estimate=cost,
    )(slab)


def undersp(x, beta: float = 1.0, threshold: float = 20.0, value: float = 1.0):
    """Computes F.softplus(x, beta, threshold) - value on TPU via Pallas."""
    orig_shape = x.shape
    orig_dtype = x.dtype
    if not jnp.issubdtype(orig_dtype, jnp.floating):
        raise TypeError(f"undersp requires a floating dtype, got {orig_dtype}")

    n = x.size
    if n == 0:                       # empty tensor: nothing to compute
        return x

    kernel = functools.partial(
        _undersp_kernel,
        beta=float(beta),
        inv_beta=1.0 / float(beta),
        threshold=float(threshold),
        value=float(value),
    )

    itemsize = jnp.dtype(orig_dtype).itemsize
    sublane = max(8, 32 // itemsize)          # 8 for f32, 16 for bf16/f16
    block_bytes = _block_bytes_for_device()
    block_rows_target = block_bytes // (_LANES * itemsize)
    block_rows_target = max(sublane, (block_rows_target // sublane) * sublane)

    if n % _LANES == 0:
        # Common path: copy-free lane-dense slab.
        rows = n // _LANES
        slab = x.reshape(rows, _LANES)
        out = _run_slab(kernel, slab, block_rows_target, orig_dtype, itemsize)
        return out.reshape(orig_shape)

    # Awkward size (not a multiple of 128).
    view = x if x.ndim >= 2 else x.reshape(1, -1)
    pad_rows = -(-view.shape[-2] // sublane) * sublane
    pad_lanes = -(-view.shape[-1] // _LANES) * _LANES
    lead = 1
    for d in view.shape[:-2]:
        lead *= d
    vmem_footprint = lead * pad_rows * pad_lanes * itemsize

    if vmem_footprint <= block_bytes:
        # Whole tensor fits in one VMEM block: single full-array block on the
        # original shape, zero host-side pad/slice copies.
        out = pl.pallas_call(
            kernel,
            out_shape=jax.ShapeDtypeStruct(view.shape, orig_dtype),
            cost_estimate=pl.CostEstimate(
                flops=5 * n, transcendentals=2 * n, bytes_accessed=2 * itemsize * n),
        )(view)
        return out.reshape(orig_shape)

    # Large AND awkward (rare): pad the flat view up to a multiple of 128 only
    # (not to a multiple of block_rows), run the slab path, slice back.
    # TODO(synk): replace with an in-kernel masked tail (scalar-prefetch n_elems
    # + masked pltpu.store on the last block) to remove the pad/slice copies.
    rows = pl.cdiv(n, _LANES)
    flat = jnp.pad(x.reshape(-1), (0, rows * _LANES - n))
    slab = flat.reshape(rows, _LANES)
    out = _run_slab(kernel, slab, block_rows_target, orig_dtype, itemsize)
    return out.reshape(-1)[:n].reshape(orig_shape)


def _reference(x, beta=1.0, threshold=20.0, value=1.0):
    xf = x.astype(jnp.float32)
    bx = beta * xf
    sp = jnp.where(bx > threshold, xf, jnp.log1p(jnp.exp(bx)) / beta)
    return (sp - value).astype(x.dtype)


if __name__ == "__main__":
    key = jax.random.PRNGKey(0)

    # NCHW activation, f32 (numel multiple of 128 -> copy-free slab path).
    x = jax.random.normal(key, (2, 4, 16, 16), dtype=jnp.float32) * 5.0
    out = jax.block_until_ready(undersp(x, beta=1.0, threshold=20.0, value=1.0))
    ref = _reference(x)
    assert out.shape == x.shape and out.dtype == x.dtype
    assert jnp.allclose(out, ref, atol=1e-5, rtol=1e-5), "f32 mismatch"

    # Awkward (non-multiple-of-128) shape exercises the single-block zero-copy path.
    x2 = jax.random.normal(jax.random.PRNGKey(1), (2, 3, 7, 5), dtype=jnp.float32) * 5.0
    out2 = jax.block_until_ready(undersp(x2, beta=2.0, threshold=20.0, value=1.0))
    ref2 = _reference(x2, beta=2.0)
    assert jnp.allclose(out2, ref2, atol=1e-5, rtol=1e-5), "awkward-shape mismatch"

    # bf16 input exercises the dtype-aware sublane handling.
    x3 = (jax.random.normal(jax.random.PRNGKey(2), (2, 4, 16, 16)) * 5.0).astype(jnp.bfloat16)
    out3 = jax.block_until_ready(undersp(x3, beta=1.0, threshold=20.0, value=1.0))
    ref3 = _reference(x3)
    assert out3.dtype == jnp.bfloat16
    assert jnp.allclose(out3.astype(jnp.float32), ref3.astype(jnp.float32),
                        atol=5e-2, rtol=5e-2), "bf16 mismatch"

    # Values across the threshold boundary (linear passthrough region).
    x4 = jnp.tile(jnp.array([-30.0, -1.0, 0.0, 0.5, 1.0, 5.0, 25.0, 50.0],
                            dtype=jnp.float32), (4, 16))  # (4, 128)
    out4 = jax.block_until_ready(undersp(x4, beta=1.0, threshold=20.0, value=1.0))
    ref4 = _reference(x4)
    assert jnp.allclose(out4, ref4, atol=1e-5, rtol=1e-5), "threshold-path mismatch"

    # Empty tensor guard.
    x5 = jnp.zeros((0, 4), dtype=jnp.float32)
    out5 = jax.block_until_ready(undersp(x5))
    assert out5.shape == (0, 4) and out5.dtype == jnp.float32

    print("KERNEL_OK")
</pallas_src>

<mosaic_0001>
module attributes {stable_mosaic.version = 11 : i64} {
  func.func @_undersp_kernel(%arg0: i32, %arg1: memref<16x128xf32, #tpu.memory_space<vmem>>, %arg2: memref<16x128xf32, #tpu.memory_space<vmem>>) attributes {dimension_semantics = [#tpu.dimension_semantics<parallel>], iteration_bounds = array<i64: 1>, scalar_prefetch = 0 : i64, scratch_operands = 0 : i64, tpu.core_type = #tpu.core_type<tc>, window_params = [{transform_indices = @transform_0, window_bounds = array<i64: 16, 128>}, {transform_indices = @transform_1, window_bounds = array<i64: 16, 128>}]} {
    %c0 = arith.constant 0 : index
    %c0_0 = arith.constant 0 : index
    %0 = vector.load %arg1[%c0, %c0_0] : memref<16x128xf32, #tpu.memory_space<vmem>>, vector<16x128xf32>
    %1 = math.exp %0 : vector<16x128xf32>
    %2 = math.log1p %1 : vector<16x128xf32>
    %cst = arith.constant 2.000000e+01 : f32
    %3 = vector.broadcast %cst : f32 to vector<16x128xf32>
    %4 = arith.cmpf ogt, %0, %3 : vector<16x128xf32>
    %5 = arith.select %4, %0, %2 : vector<16x128xi1>, vector<16x128xf32>
    %cst_1 = arith.constant 1.000000e+00 : f32
    %6 = vector.broadcast %cst_1 : f32 to vector<16x128xf32>
    %7 = arith.subf %5, %6 : vector<16x128xf32>
    %c0_2 = arith.constant 0 : index
    %c0_3 = arith.constant 0 : index
    %8 = vector.load %arg2[%c0_2, %c0_3] : memref<16x128xf32, #tpu.memory_space<vmem>>, vector<16x128xf32>
    tpu.vector_store %arg2[%c0_2, %c0_3], %7 {strides = array<i32>} : memref<16x128xf32, #tpu.memory_space<vmem>>, vector<16x128xf32>,
    return
  }
  func.func @transform_0(%arg0: i32) -> (i32, i32) {
    %c0_i32 = arith.constant 0 : i32
    %c0_i32_0 = arith.constant 0 : i32
    return %arg0, %c0_i32 : i32, i32
  }
  func.func @transform_1(%arg0: i32) -> (i32, i32) {
    %c0_i32 = arith.constant 0 : i32
    %c0_i32_0 = arith.constant 0 : i32
    return %arg0, %c0_i32 : i32, i32
  }
}

</mosaic_0001>

<llo_original>
// kernel: tpu_custom_call.1
$region0: #{tpu_custom_call.1}
  #allocation0 [shape = 'u32[]', space=smem, size = 0x4, offset = 0x4, fixed_abs, tag = 'smem constant byte address 0x4 - core index']
  #allocation1 [shape = 'u32[144,128]{1,0:T(1,128)}', space=vmem, size = 0x12000, scoped, tag = 'internal scratch']
  %s0 = inlined_call_operand.hbm [shape: f32[16,128], index: 0, kind: input, shape index: {}]
  %s1 = inlined_call_operand.hbm [shape: f32[16,128], index: 1, kind: output, shape index: {}]
  %s2 = sld [smem:[#allocation0]]
  $region18: #{tpu_custom_call.1} parent=0
    _
  %s4 = ssub.s32 1, %s2
  %s5 = scalar_select 0, %s4, %s2
  $region1: #{tpu_custom_call.1} parent=0
    #allocation2 [shape = 'u8[8192]{0}', space=vmem, size = 0x2000, scoped, tag = 'input window, operand 0, single buffered']
    #allocation3 [shape = 's32[1]{0}', space=sflag, size = 0x4, scoped, tag = 'scoped memory for tpu_custom_call.1']
    #allocation4 [shape = 's32[1]{0}', space=sflag, size = 0x4, scoped, tag = 'scoped memory for tpu_custom_call.1']
    #allocation5 [shape = 'u8[8192]{0}', space=vmem, size = 0x2000, scoped, tag = 'output window, operand 0, single buffered']
    %6 = vsyncpa [#allocation3], 0
    %7 = vsyncpa [#allocation4], 0
    // Predicated region
    $region2: #{tpu_custom_call.1} parent=1 // pred_check
      _
    $region3: #{tpu_custom_call.1} parent=1 // pred_check_branch
      %9 = sbr.rel (0) target = $region5
    $region4: #{tpu_custom_call.1} parent=1 // pred_region
      %s11 = ssub.s32 256, 256
      %12 = vsyncadd [#allocation3], %s11
      %s13 = sshll.u32 [#allocation2], 4
      %s14 = int_to_ptr.vmem [resolvable:$true] %s13
      %19 = dma.hbm_to_vmem [thread:$0]  %s0, 256, %s14, [#allocation3], 128, 128, 8
    $region5: #{tpu_custom_call.1} parent=1 // pred_fallthru
      _
    // Predicated region
    $region6: #{tpu_custom_call.1} parent=1 // pred_check
      _
    $region7: #{tpu_custom_call.1} parent=1 // pred_check_branch
      %21 = sbr.rel (0) target = $region9
    $region8: #{tpu_custom_call.1} parent=1 // pred_region
      %22 = dma.done [#allocation3], 256
    $region9: #{tpu_custom_call.1} parent=1 // pred_fallthru
      _
    %v23 = vld [vmem:[#allocation2] sm:$0xff]
    %v24 = vld [vmem:[#allocation2 + $0x8] sm:$0xff]
    %v25 = vmul.f32 %v23, 1.442695
    %v26 = vpow.pop %v25
    %v27 = vmul.f32 %v24, 1.442695
    %v28 = vpow.pop %v27
    %v29 = vadd.f32 %v26, 1.0
    %v30 = vlog2.pop %v29
    %v31 = vmul.f32 %v30, 0.6931472
    %v32 = vmul.f32 -0.5, %v26
    %v33 = vadd.f32 %v32, 1.0
    %v34 = vmul.f32 %v33, %v26
    %v35 = vand.u32 2147483647, %v26
    %vm36 = vcmp.lt.f32.partialorder %v35, 0.0004427343
    %v37 = vsel %vm36, %v34, %v31
    %v38 = vadd.f32 %v28, 1.0
    %v39 = vlog2.pop %v38
    %v40 = vmul.f32 %v39, 0.6931472
    %v41 = vmul.f32 -0.5, %v28
    %v42 = vadd.f32 %v41, 1.0
    %v43 = vmul.f32 %v42, %v28
    %v44 = vand.u32 2147483647, %v28
    %vm45 = vcmp.lt.f32.partialorder %v44, 0.0004427343
    %v46 = vsel %vm45, %v43, %v40
    %vm47 = vcmp.gt.f32.partialorder %v23, 20.0
    %vm48 = vcmp.gt.f32.partialorder %v24, 20.0
    %v49 = vsel %vm47, %v23, %v37
    %v50 = vsel %vm48, %v24, %v46
    %v51 = vsub.f32 %v49, 1.0
    %v52 = vsub.f32 %v50, 1.0
    %53 = vst [vmem:[#allocation5] sm:$0xff] %v51
    %54 = vst [vmem:[#allocation5 + $0x8] sm:$0xff] %v52
    // Predicated region
    $region10: #{tpu_custom_call.1} parent=1 // pred_check
      _
    $region11: #{tpu_custom_call.1} parent=1 // pred_check_branch
      %56 = sbr.rel (0) target = $region13
    $region12: #{tpu_custom_call.1} parent=1 // pred_region
      %s58 = ssub.s32 256, 256
      %59 = vsyncadd [#allocation4], %s58
      %s60 = sshll.u32 [#allocation5], 4
      %s61 = int_to_ptr.vmem [resolvable:$true] %s60
      %66 = dma.vmem_to_hbm [thread:$0]  %s61, 256, %s1, [#allocation4], 128, 128, 8
    $region13: #{tpu_custom_call.1} parent=1 // pred_fallthru
      _
    // Predicated region
    $region14: #{tpu_custom_call.1} parent=1 // pred_check
      _
    $region15: #{tpu_custom_call.1} parent=1 // pred_check_branch
      %68 = sbr.rel (0) target = $region17
    $region16: #{tpu_custom_call.1} parent=1 // pred_region
      %69 = dma.done [#allocation4], 256
    $region17: #{tpu_custom_call.1} parent=1 // pred_fallthru
      _
    %70 = vsyncpa [#allocation3], 1
    %71 = vsyncpa [#allocation4], 1

</llo_original>
